<compile_context>
chip_gen: v7x
topology: tpu7x:2x2x1
jax: 0.10.0
libtpu: 0.0.40
codegen_flags: <defaults>
</compile_context>

<pallas_src>
import math

import jax
import jax.numpy as jnp
from jax.experimental import pallas as pl
from jax.experimental.pallas import tpu as pltpu


def _round_down(x: int, m: int) -> int:
    return (x // m) * m


def _round_up(x: int, m: int) -> int:
    return ((x + m - 1) // m) * m


def _build_pe(d_model: int, max_len: int = 5000, dtype=jnp.float32) -> jnp.ndarray:
    """Sinusoidal positional-encoding table, shape [max_len, d_model]."""
    position = jnp.arange(0, max_len, dtype=jnp.float32)[:, None]             # [L, 1]
    div_term = jnp.exp(
        jnp.arange(0, d_model, 2, dtype=jnp.float32) * (-math.log(10000.0) / d_model)
    )                                                                          # [ceil(D/2)]
    args = position * div_term                                                 # [L, D/2]
    pe = jnp.zeros((max_len, d_model), dtype=jnp.float32)
    pe = pe.at[:, 0::2].set(jnp.sin(args))
    pe = pe.at[:, 1::2].set(jnp.cos(args))
    # NOTE: storing pe in the compute dtype (e.g. bf16) rounds slightly
    # differently from PyTorch's x(bf16)+pe(f32) promotion; acceptable here.
    return pe.astype(dtype)


def _add_pe_kernel(x_ref, pe_ref, o_ref):
    # x/o: (rb, ts, D) or (rb, tf);  pe: (1, ts, D) or (1, tf).
    # Pure VPU add, pe tile broadcasts over the leading (batch) block dim.
    o_ref[...] = x_ref[...] + pe_ref[...]


def _vmem_limit(working_set_bytes: int) -> int:
    # Real working set + 50% slack + 2 MiB headroom, capped for v7x (64 MiB VMEM).
    return int(min(40 * 1024 * 1024,
                   max(4 * 1024 * 1024, working_set_bytes * 3 // 2 + (2 << 20))))


def _pe_3d_path(x, pe, B, S, D, itemsize, sub, budget, alias):
    """Lane-dense d_model (D >= 128): 3-D blocks, no reshapes of x or out."""
    row_bytes = D * itemsize

    # S tile (sublane dim of the blocks): multiple of the packed sublane group.
    if S <= sub:
        ts = S
    else:
        ts_budget = max(sub, _round_down(budget // (6 * row_bytes), sub))
        ts = max(sub, min(_round_down(S, sub), ts_budget, 1024))

    # Batch tile (leading block dim -> no (8,128) constraint).
    per_row = 4 * ts * row_bytes                 # x + out blocks, double-buffered
    pe_bytes = 2 * ts * row_bytes                # pe block, double-buffered
    rb = int(max(1, min(B, (budget - pe_bytes) // per_row)))

    # v7x megacore: ensure >= 2 parallel blocks whenever possible.
    if pl.cdiv(B, rb) * pl.cdiv(S, ts) == 1:
        if B >= 2:
            rb = (B + 1) // 2
        elif S > 8:
            half = _round_up((S + 1) // 2, 8)
            if half < S:
                ts = half

    n_s, n_b = pl.cdiv(S, ts), pl.cdiv(B, rb)

    # pe block's sublane dim must be a multiple of 8 or the full table extent.
    # Only slice (a tiny copy) in the corner case ts == S with S % 8 != 0.
    pe_in = pe if ts % 8 == 0 else pe[:S]
    pe3 = pe_in[None]                            # (1, L', D): free unit-dim reshape

    ws = 2 * (2 * rb + 1) * ts * row_bytes
    return pl.pallas_call(
        _add_pe_kernel,
        out_shape=jax.ShapeDtypeStruct((B, S, D), x.dtype),
        grid_spec=pltpu.PrefetchScalarGridSpec(
            num_scalar_prefetch=0,
            grid=(n_s, n_b),                     # batch innermost -> pe DMA reused
            in_specs=[
                pl.BlockSpec((rb, ts, D), lambda s, b: (b, s, 0)),   # x
                pl.BlockSpec((1, ts, D), lambda s, b: (0, s, 0)),    # pe, shared over batch
            ],
            out_specs=pl.BlockSpec((rb, ts, D), lambda s, b: (b, s, 0)),
        ),
        compiler_params=pltpu.CompilerParams(
            dimension_semantics=("parallel", "parallel"),
            vmem_limit_bytes=_vmem_limit(ws),
        ),
        input_output_aliases=alias,
    )(x, pe3)


def _pe_flat_path(x, pe, B, S, D, itemsize, sub, budget, alias):
    """Fallback for small d_model (D < 128): flatten (S, D) to keep stores
    lane-dense.  The small per-call pe[:S] flatten is accepted here."""
    flat = S * D
    x2 = x.reshape(B, flat)
    pe2 = pe[:S].reshape(1, flat)                # already in x.dtype; tiny for D < 128

    rb = B if B <= sub else sub                  # dtype-aware sublane rows
    if flat <= 128:
        tf = flat
    else:
        tf_budget = budget // (2 * (2 * rb + 1) * itemsize)
        tf = flat if flat <= tf_budget else max(128, _round_down(tf_budget, 128))

    # v7x megacore: split the lane axis if the whole tensor is one block.
    if pl.cdiv(flat, tf) * pl.cdiv(B, rb) == 1 and flat >= 256:
        tf = _round_up((flat + 1) // 2, 128)

    n_f, n_b = pl.cdiv(flat, tf), pl.cdiv(B, rb)

    ws = 2 * (2 * rb + 1) * tf * itemsize
    out2 = pl.pallas_call(
        _add_pe_kernel,
        out_shape=jax.ShapeDtypeStruct((B, flat), x.dtype),
        grid_spec=pltpu.PrefetchScalarGridSpec(
            num_scalar_prefetch=0,
            grid=(n_f, n_b),                     # batch innermost -> pe DMA reused
            in_specs=[
                pl.BlockSpec((rb, tf), lambda f, b: (b, f)),         # x
                pl.BlockSpec((1, tf), lambda f, b: (0, f)),          # pe, shared over batch
            ],
            out_specs=pl.BlockSpec((rb, tf), lambda f, b: (b, f)),
        ),
        compiler_params=pltpu.CompilerParams(
            dimension_semantics=("parallel", "parallel"),
            vmem_limit_bytes=_vmem_limit(ws),
        ),
        input_output_aliases=alias,
    )(x2, pe2)
    return out2.reshape(B, S, D)


def positional_encoding(
    x: jnp.ndarray,
    pe_table: jnp.ndarray,
    *,
    vmem_budget_bytes: int = 16 * 1024 * 1024,
    donate_x: bool = False,
) -> jnp.ndarray:
    """x: [B, S, D]; pe_table: [max_len, D] (ideally already in x.dtype)."""
    B, S, D = x.shape
    max_len, d_model = pe_table.shape
    if S > max_len:
        raise ValueError(f"sequence length {S} exceeds max_len {max_len}")
    if d_model != D:
        raise ValueError(f"d_model mismatch: x has {D}, pe has {d_model}")

    # No-op when the table was built in the right dtype at init time.
    pe = pe_table if pe_table.dtype == x.dtype else pe_table.astype(x.dtype)

    itemsize = x.dtype.itemsize
    sub = max(8, 32 // itemsize)                 # sublane group: 8 f32, 16 bf16, 32 int8
    alias = {0: 0} if donate_x else {}

    if D >= 128:
        return _pe_3d_path(x, pe, B, S, D, itemsize, sub, vmem_budget_bytes, alias)
    return _pe_flat_path(x, pe, B, S, D, itemsize, sub, vmem_budget_bytes, alias)


class PositionalEncoding:
    """Mirrors the PyTorch module: builds the sinusoidal table once at init."""

    def __init__(self, d_model: int, max_len: int = 5000, dtype=jnp.float32):
        self.pe = _build_pe(d_model, max_len=max_len, dtype=dtype)   # [max_len, d_model]

    def __call__(self, x: jnp.ndarray, **kwargs) -> jnp.ndarray:
        return positional_encoding(x, self.pe, **kwargs)


if __name__ == "__main__":
    # 1) Primary shape implied by the module usage: batch=2, seq=8, d_model=32
    #    (d_model < 128 -> flat fallback path; lane axis split for megacore).
    B, S, D = 2, 8, 32
    mod = PositionalEncoding(D, max_len=64)
    x = jax.random.normal(jax.random.PRNGKey(0), (B, S, D), dtype=jnp.float32)
    ref = x + mod.pe[None, :S, :]
    out = jax.block_until_ready(mod(x))
    assert out.shape == (B, S, D)
    assert jnp.allclose(out, ref, atol=1e-6), "mismatch (flat path, f32)"

    # 2) Lane-dense d_model -> 3-D path (no reshapes), f32, ragged batch.
    B, S, D = 3, 24, 128
    mod = PositionalEncoding(D, max_len=32)
    x = jax.random.normal(jax.random.PRNGKey(0), (B, S, D), dtype=jnp.float32)
    ref = x + mod.pe[None, :S, :]
    out = jax.block_until_ready(mod(x))
    assert jnp.allclose(out, ref, atol=1e-6), "mismatch (3-D path, f32)"

    # 3) bf16: dtype-aware sublane tiles + 3-D path, pe table pre-built in bf16.
    B, S, D = 4, 32, 128
    mod = PositionalEncoding(D, max_len=32, dtype=jnp.bfloat16)
    x = jax.random.normal(jax.random.PRNGKey(0), (B, S, D), dtype=jnp.bfloat16)
    ref = x + mod.pe[None, :S, :]
    out = jax.block_until_ready(mod(x))
    assert jnp.allclose(out.astype(jnp.float32), ref.astype(jnp.float32),
                        atol=1e-2), "mismatch (3-D path, bf16)"

    # 4) Flat path with masked edge blocks (B not multiple of 8, flat not mult of 128).
    B, S, D = 12, 10, 20
    mod = PositionalEncoding(D, max_len=16)
    x = jax.random.normal(jax.random.PRNGKey(0), (B, S, D), dtype=jnp.float32)
    ref = x + mod.pe[None, :S, :]
    out = jax.block_until_ready(mod(x))
    assert jnp.allclose(out, ref, atol=1e-6), "mismatch (flat path, masked edges)"

    print("KERNEL_OK")
</pallas_src>

<mosaic_0001>
module attributes {stable_mosaic.version = 11 : i64} {
  func.func @_add_pe_kernel(%arg0: i32, %arg1: i32, %arg2: memref<2x128xf32, #tpu.memory_space<vmem>>, %arg3: memref<1x128xf32, #tpu.memory_space<vmem>>, %arg4: memref<2x128xf32, #tpu.memory_space<vmem>>) attributes {dimension_semantics = [#tpu.dimension_semantics<parallel>, #tpu.dimension_semantics<parallel>], iteration_bounds = array<i64: 2, 1>, scalar_prefetch = 0 : i64, scratch_operands = 0 : i64, tpu.core_type = #tpu.core_type<tc>, window_params = [{transform_indices = @transform_0, window_bounds = array<i64: 2, 128>}, {transform_indices = @transform_1, window_bounds = array<i64: 1, 128>}, {transform_indices = @transform_2, window_bounds = array<i64: 2, 128>}]} {
    %c0 = arith.constant 0 : index
    %c0_0 = arith.constant 0 : index
    %0 = vector.load %arg2[%c0, %c0_0] : memref<2x128xf32, #tpu.memory_space<vmem>>, vector<2x128xf32>
    %c0_1 = arith.constant 0 : index
    %c0_2 = arith.constant 0 : index
    %1 = vector.load %arg3[%c0_1, %c0_2] : memref<1x128xf32, #tpu.memory_space<vmem>>, vector<1x128xf32>
    %2 = vector.broadcast %1 : vector<1x128xf32> to vector<2x128xf32>
    %3 = arith.addf %0, %2 : vector<2x128xf32>
    %c0_3 = arith.constant 0 : index
    %c0_4 = arith.constant 0 : index
    %4 = vector.load %arg4[%c0_3, %c0_4] : memref<2x128xf32, #tpu.memory_space<vmem>>, vector<2x128xf32>
    tpu.vector_store %arg4[%c0_3, %c0_4], %3 {strides = array<i32>} : memref<2x128xf32, #tpu.memory_space<vmem>>, vector<2x128xf32>,
    return
  }
  func.func @transform_0(%arg0: i32, %arg1: i32) -> (i32, i32) {
    %c0_i32 = arith.constant 0 : i32
    return %arg1, %arg0 : i32, i32
  }
  func.func @transform_1(%arg0: i32, %arg1: i32) -> (i32, i32) {
    %c0_i32 = arith.constant 0 : i32
    %c0_i32_0 = arith.constant 0 : i32
    return %c0_i32, %arg0 : i32, i32
  }
  func.func @transform_2(%arg0: i32, %arg1: i32) -> (i32, i32) {
    %c0_i32 = arith.constant 0 : i32
    return %arg1, %arg0 : i32, i32
  }
}

</mosaic_0001>

<llo_original>
// kernel: tpu_custom_call.1
$region0: #{tpu_custom_call.1}
  #allocation0 [shape = 'u32[]', space=smem, size = 0x4, offset = 0x4, fixed_abs, tag = 'smem constant byte address 0x4 - core index']
  #allocation1 [shape = 'u32[144,128]{1,0:T(1,128)}', space=vmem, size = 0x12000, scoped, tag = 'internal scratch']
  %s0 = inlined_call_operand.hbm [shape: f32[2,256], index: 0, kind: input, shape index: {}]
  %s1 = inlined_call_operand.vmem [shape: f32[1,256], index: 1, kind: input, shape index: {}]
  %s2 = inlined_call_operand.hbm [shape: f32[2,256], index: 2, kind: output, shape index: {}]
  %s3 = sld [smem:[#allocation0]]
  $region45: #{tpu_custom_call.1} parent=0
    _
  %s5 = ssub.s32 1, %s3
  %s6 = scalar_select 0, %s5, %s3
  $region1: #{tpu_custom_call.1} parent=0
    #allocation2 [shape = 'u8[2048]{0}', space=vmem, size = 0x800, scoped, tag = 'input window, operand 0']
    #allocation3 [shape = 's32[2]{0}', space=sflag, size = 0x8, scoped, tag = 'scoped memory for tpu_custom_call.1']
    #allocation4 [shape = 's32[2]{0}', space=sflag, size = 0x8, scoped, tag = 'scoped memory for tpu_custom_call.1']
    #allocation5 [shape = 'u8[2048]{0}', space=vmem, size = 0x800, scoped, tag = 'output window, operand 0']
    %7 = vsyncpa [#allocation3], 0
    %s8 = scalar_lea.sflag [#allocation3], 1
    %9 = vsyncpa %s8, 0
    %10 = vsyncpa [#allocation4], 0
    %s11 = scalar_lea.sflag [#allocation4], 1
    %12 = vsyncpa %s11, 0
    loop: start=0, step=1, limit=4
    $region2: #{tpu_custom_call.1} parent=1 // loop_pre_header
      _
    $region3: #{tpu_custom_call.1} parent=1 // loop_header
      %s14 = sphi 0, %s18
      %p15 = scmp.ge.s32.totalorder %s14, 4
      %s21 = sphi 0, %s33
      %s22 = sphi 0, %s29
      %s23 = sphi 0, %s21
      %s24 = sphi 0, %s22
      %s25 = sphi 0, %s23
      %s26 = sphi 0, %s24
      %s38 = sphi 0, %s40
      %s41 = sphi 0, %s38
      %s42 = sphi 0, %s41
      %s58 = sphi 0, %s42
      %s64 = sphi 0, %s66
      %s67 = sphi 0, %s64
      %s68 = sphi 0, %s67
      %s84 = sphi 0, %s68
      %s92 = sphi 0, %s94
      %s95 = sphi 0, %s92
      %s96 = sphi 0, %s95
      %s112 = sphi 0, %s96
    $region4: #{tpu_custom_call.1} parent=1 // loop_header_branch
      %17 = sbr.rel (%p15) target = $region8
    $region5: #{tpu_custom_call.1} parent=1 // loop_body
      %s19 = ssub.s32 %s14, 1
      %s20 = ssub.s32 %s14, 2
      %s27 = sadd.s32 1, %s22
      %p28 = scmp.ge.s32.totalorder %s27, 1
      %s29 = scalar_select %p28, 0, %s27
      %s30 = sadd.s32 1, %s21
      %s31 = scalar_select %p28, %s30, %s21
      %p32 = scmp.ge.s32.totalorder %s31, 2
      %s33 = scalar_select %p32, 0, %s31
      %s34 = ssub.s32 %s22, %s29
      %s35 = ssub.s32 %s21, %s33
      %s36 = sor.u32 %s34, %s35
      %p37 = scmp.eq.s32.totalorder %s36, 0
      %s39 = sadd.s32 %s38, 1
      %s40 = scalar_select %p37, %s38, %s39
      %p43 = pneg %p37
      %p44 = scmp.eq.s32.totalorder %s14, 1
      %p45 = por %p43, %p44
      %p46 = scmp.ne.s32.totalorder %s38, %s41
      %p47 = scmp.eq.s32.totalorder %s14, 0
      %p48 = por %p46, %p47
      %p49 = scmp.ne.s32.totalorder %s38, %s41
      %p50 = scmp.eq.s32.totalorder %s19, 1
      %p51 = por %p49, %p50
      %p52 = scmp.ne.s32.totalorder %s41, %s42
      %p53 = scmp.eq.s32.totalorder %s19, 0
      %p54 = por %p52, %p53
      %p55 = scmp.ne.s32.totalorder %s41, %s42
      %p56 = scmp.eq.s32.totalorder %s20, 1
      %p57 = por %p55, %p56
      %p59 = scmp.ne.s32.totalorder %s42, %s58
      %p60 = scmp.eq.s32.totalorder %s20, 0
      %p61 = por %p59, %p60
      %s62 = ssub.s32 %s21, %s33
      %p63 = scmp.eq.s32.totalorder %s62, 0
      %s65 = sadd.s32 %s64, 1
      %s66 = scalar_select %p63, %s64, %s65
      %p69 = pneg %p63
      %p70 = scmp.eq.s32.totalorder %s14, 1
      %p71 = por %p69, %p70
      %p72 = scmp.ne.s32.totalorder %s64, %s67
      %p73 = scmp.eq.s32.totalorder %s14, 0
      %p74 = por %p72, %p73
      %p75 = scmp.ne.s32.totalorder %s64, %s67
      %p76 = scmp.eq.s32.totalorder %s19, 1
      %p77 = por %p75, %p76
      %p78 = scmp.ne.s32.totalorder %s67, %s68
      %p79 = scmp.eq.s32.totalorder %s19, 0
      %p80 = por %p78, %p79
      %p81 = scmp.ne.s32.totalorder %s67, %s68
      %p82 = scmp.eq.s32.totalorder %s20, 1
      %p83 = por %p81, %p82
      %p85 = scmp.ne.s32.totalorder %s68, %s84
      %p86 = scmp.eq.s32.totalorder %s20, 0
      %p87 = por %p85, %p86
      %s88 = ssub.s32 %s22, %s29
      %s89 = ssub.s32 %s21, %s33
      %s90 = sor.u32 %s88, %s89
      %p91 = scmp.eq.s32.totalorder %s90, 0
      %s93 = sadd.s32 %s92, 1
      %s94 = scalar_select %p91, %s92, %s93
      %p97 = pneg %p91
      %p98 = scmp.eq.s32.totalorder %s14, 1
      %p99 = por %p97, %p98
      %p100 = scmp.ne.s32.totalorder %s92, %s95
      %p101 = scmp.eq.s32.totalorder %s14, 0
      %p102 = por %p100, %p101
      %p103 = scmp.ne.s32.totalorder %s92, %s95
      %p104 = scmp.eq.s32.totalorder %s19, 1
      %p105 = por %p103, %p104
      %p106 = scmp.ne.s32.totalorder %s95, %s96
      %p107 = scmp.eq.s32.totalorder %s19, 0
      %p108 = por %p106, %p107
      %p109 = scmp.ne.s32.totalorder %s95, %s96
      %p110 = scmp.eq.s32.totalorder %s20, 1
      %p111 = por %p109, %p110
      %p113 = scmp.ne.s32.totalorder %s96, %s112
      %p114 = scmp.eq.s32.totalorder %s20, 0
      %p115 = por %p113, %p114
      %p116 = scmp.le.s32.totalorder 1, %s14
      %p117 = scmp.lt.s32.totalorder %s14, 3
      %p118 = pnand %p116, %p117
      %p119 = pneg %p118
      // Predicated region
      $region9: #{tpu_custom_call.1} parent=5 // pred_check
        _
      $region10: #{tpu_custom_call.1} parent=5 // pred_check_branch
        %121 = sbr.rel (%p118) target = $region12
      $region11: #{tpu_custom_call.1} parent=5 // pred_region
        %s122 = ssub.s32 %s14, 1
      $region12: #{tpu_custom_call.1} parent=5 // pred_fallthru
        _
      %p123 = scmp.lt.s32.totalorder %s14, 2
      // Predicated region
      $region13: #{tpu_custom_call.1} parent=5 // pred_check
        %p124 = pneg %p123
      $region14: #{tpu_custom_call.1} parent=5 // pred_check_branch
        %126 = sbr.rel (%p124) target = $region16
      $region15: #{tpu_custom_call.1} parent=5 // pred_region
        // Predicated region
        $region17: #{tpu_custom_call.1} parent=15 // pred_check
          %p127 = pneg %p48
        $region18: #{tpu_custom_call.1} parent=15 // pred_check_branch
          %129 = sbr.rel (%p127) target = $region20
        $region19: #{tpu_custom_call.1} parent=15 // pred_region
          %s130 = sand.u32 %s38, 1
          %s131 = scalar_lea.sflag [#allocation3], %s130
          %s132 = sand.u32 %s38, 1
          %s133 = smul.addr %s132, 2
          %s134 = scalar_lea.vmem [#allocation2], %s133
          %s136 = ssub.s32 32, 32
          %137 = vsyncadd %s131, %s136
          %s138 = smul.addr %s22, 2
          %s139 = sadd.s32 %s21, %s138
          %s140 = smul.addr %s139, 32
          %s141 = scalar_lea.hbm %s0, %s140
          %s143 = sshll.u32 %s134, 4
          %s144 = int_to_ptr.vmem [resolvable:$true] %s143
          %146 = dma.hbm_to_vmem [thread:$0]  %s141, 32, %s144, %s131
        $region20: #{tpu_custom_call.1} parent=15 // pred_fallthru
          _
        // Predicated region
        $region21: #{tpu_custom_call.1} parent=15 // pred_check
          %p147 = pneg %p74
        $region22: #{tpu_custom_call.1} parent=15 // pred_check_branch
          %149 = sbr.rel (%p147) target = $region24
        $region23: #{tpu_custom_call.1} parent=15 // pred_region
          %p150 = scmp.lt.s32.totalorder %s21, 1
          %s151 = scalar_select %p150, %s21, 1
          %s152 = scalar_lea.vmem %s1, %s151
        $region24: #{tpu_custom_call.1} parent=15 // pred_fallthru
          _
      $region16: #{tpu_custom_call.1} parent=5 // pred_fallthru
        _
      %p153 = scmp.le.s32.totalorder 1, %s14
      %p154 = scmp.lt.s32.totalorder %s14, 3
      %p155 = pnand %p153, %p154
      %p156 = pneg %p155
      // Predicated region
      $region25: #{tpu_custom_call.1} parent=5 // pred_check
        _
      $region26: #{tpu_custom_call.1} parent=5 // pred_check_branch
        %158 = sbr.rel (%p155) target = $region28
      $region27: #{tpu_custom_call.1} parent=5 // pred_region
        %s159 = ssub.s32 %s14, 1
        %s160 = sand.u32 %s41, 1
        %s161 = scalar_lea.sflag [#allocation3], %s160
        %s162 = sand.u32 %s41, 1
        %s163 = smul.addr %s162, 2
        %s164 = scalar_lea.vmem [#allocation2], %s163
        // Predicated region
        $region29: #{tpu_custom_call.1} parent=27 // pred_check
          %p165 = pneg %p54
        $region30: #{tpu_custom_call.1} parent=27 // pred_check_branch
          %167 = sbr.rel (%p165) target = $region32
        $region31: #{tpu_custom_call.1} parent=27 // pred_region
          %168 = dma.done %s161, 32
        $region32: #{tpu_custom_call.1} parent=27 // pred_fallthru
          _
        %s169 = sand.u32 %s41, 1
        %s170 = scalar_lea.sflag [#allocation3], %s169
        %s171 = sand.u32 %s41, 1
        %s172 = smul.addr %s171, 2
        %s173 = scalar_lea.vmem [#allocation2], %s172
        %p174 = pneg %p54
        %p175 = pneg %p51
        %p176 = scmp.lt.s32.totalorder %s23, 1
        %s177 = scalar_select %p176, %s23, 1
        %s178 = scalar_lea.vmem %s1, %s177
        %p179 = pneg %p80
        %p180 = pneg %p77
        %p181 = pneg %p108
        %p182 = pneg %p105
        %s183 = sand.u32 %s95, 1
        %s184 = scalar_lea.sflag [#allocation4], %s183
        %s185 = sand.u32 %s95, 1
        %s186 = smul.addr %s185, 2
        %s187 = scalar_lea.vmem [#allocation5], %s186
        %p188 = scmp.lt.s32.totalorder %s23, 1
        %s189 = scalar_select %p188, %s23, 1
        %s190 = scalar_lea.vmem %s1, %s189
        %v191 = vld [vmem:[%s164] sm:$0x3]
        %v192 = vld [vmem:[%s190] sm:$0x1]
        %v194 = vlaneseq
        %v195 = vshrl.u32 %v194, 7
        %v196 = vsub.s32 0, %v195
        %v197 = vrot.slane %v192, %v196
        %v199 = vadd.f32 %v191, %v197
        %200 = vst [vmem:[%s187] sm:$0x3] %v199
        %s201 = sand.u32 %s95, 1
        %s202 = scalar_lea.sflag [#allocation4], %s201
        %s203 = sand.u32 %s95, 1
        %s204 = smul.addr %s203, 2
        %s205 = scalar_lea.vmem [#allocation5], %s204
        // Predicated region
        $region33: #{tpu_custom_call.1} parent=27 // pred_check
          %p206 = pneg %p105
        $region34: #{tpu_custom_call.1} parent=27 // pred_check_branch
          %208 = sbr.rel (%p206) target = $region36
        $region35: #{tpu_custom_call.1} parent=27 // pred_region
          %s210 = ssub.s32 32, 32
          %211 = vsyncadd %s202, %s210
          %s212 = smul.addr %s24, 2
          %s213 = sadd.s32 %s23, %s212
          %s214 = smul.addr %s213, 32
          %s215 = scalar_lea.hbm %s2, %s214
          %s217 = sshll.u32 %s205, 4
          %s218 = int_to_ptr.vmem [resolvable:$true] %s217
          %220 = dma.vmem_to_hbm [thread:$0]  %s218, 32, %s215, %s202
        $region36: #{tpu_custom_call.1} parent=27 // pred_fallthru
          _
      $region28: #{tpu_custom_call.1} parent=5 // pred_fallthru
        _
      %p221 = scmp.le.s32.totalorder 2, %s14
      // Predicated region
      $region37: #{tpu_custom_call.1} parent=5 // pred_check
        %p222 = pneg %p221
      $region38: #{tpu_custom_call.1} parent=5 // pred_check_branch
        %224 = sbr.rel (%p222) target = $region40
      $region39: #{tpu_custom_call.1} parent=5 // pred_region
        %s225 = ssub.s32 %s14, 2
        // Predicated region
        $region41: #{tpu_custom_call.1} parent=39 // pred_check
          %p226 = pneg %p111
        $region42: #{tpu_custom_call.1} parent=39 // pred_check_branch
          %228 = sbr.rel (%p226) target = $region44
        $region43: #{tpu_custom_call.1} parent=39 // pred_region
          %s229 = sand.u32 %s96, 1
          %s230 = scalar_lea.sflag [#allocation4], %s229
          %s231 = sand.u32 %s96, 1
          %s232 = smul.addr %s231, 2
          %s233 = scalar_lea.vmem [#allocation5], %s232
          %234 = dma.done %s230, 32
        $region44: #{tpu_custom_call.1} parent=39 // pred_fallthru
          _
      $region40: #{tpu_custom_call.1} parent=5 // pred_fallthru
        _
    $region6: #{tpu_custom_call.1} parent=1 // loop_footer
      %s18 = sadd.s32 1, %s14
    $region7: #{tpu_custom_call.1} parent=1 // loop_footer_branch
      %13 = sbr.rel target = $region3
    $region8: #{tpu_custom_call.1} parent=1 // loop_exit
      _
    %235 = vsyncpa [#allocation3], 1
    %s236 = scalar_lea.sflag [#allocation3], 1
    %237 = vsyncpa %s236, 1
    %238 = vsyncpa [#allocation4], 1
    %s239 = scalar_lea.sflag [#allocation4], 1
    %240 = vsyncpa %s239, 1

</llo_original>
